<compile_context>
chip_gen: v5e
topology: v5e:2x2
jax: 0.10.0
libtpu: 0.0.40
codegen_flags: <defaults>
</compile_context>

<pallas_src>
import jax
import jax.numpy as jnp
from jax.experimental import pallas as pl
from jax.experimental.pallas import tpu as pltpu


def _round_up(n, m):
    return ((n + m - 1) // m) * m


def _mlp_kernel(x_ref, w1_ref, b1_ref, w2_ref, b2_ref, w3_ref, b3_ref, o_ref):
    # In-kernel cast of x (HBM keeps the original f32, true-K layout).
    x = x_ref[...].astype(w1_ref.dtype)
    # h1 = relu(x @ W1 + b1) -- MXU matmul, f32 accumulation.
    h1 = jnp.dot(x, w1_ref[...], preferred_element_type=jnp.float32)
    h1 = jnp.maximum(h1 + b1_ref[...], 0.0).astype(w2_ref.dtype)
    # h2 = relu(h1 @ W2 + b2)
    h2 = jnp.dot(h1, w2_ref[...], preferred_element_type=jnp.float32)
    h2 = jnp.maximum(h2 + b2_ref[...], 0.0).astype(w3_ref.dtype)
    # out = h2 @ W3 + b3 (true-N output; masked store for small N)
    out = jnp.dot(h2, w3_ref[...], preferred_element_type=jnp.float32)
    o_ref[...] = (out + b3_ref[...]).astype(o_ref.dtype)


def _pick_tile_b(B, K, H1_p, H2_p, N, max_tile_b, vmem_budget_bytes=24 << 20):
    """Batch tile: multiple of 16, VMEM-budget-aware (v7x 64 MiB), >= 4 grid steps."""
    if B <= 16:
        return _round_up(max(B, 1), 8)
    # Per-row VMEM bytes: double-buffered f32 x + out tiles, plus the f32 and bf16
    # copies of both hidden activations kept live inside the kernel.
    per_row = 2 * K * 4 + 2 * N * 4 + (H1_p + H2_p) * 6
    vmem_cap = max(16, ((vmem_budget_bytes // per_row) // 16) * 16)
    # Keep >= 4 grid steps so "parallel" can shard across v7x's 2 TensorCores and the
    # BlockSpec pipeline has work to overlap (~0.35 us/step overhead is cheap).
    four_steps = _round_up(pl.cdiv(B, 4), 16)
    return int(max(16, min(max_tile_b, vmem_cap, four_steps)))


def _forward_impl(x, params, *, max_tile_b, use_bf16, single_buffer_weights):
    w1, b1 = params["w1"], params["b1"]
    w2, b2 = params["w2"], params["b2"]
    w3, b3 = params["w3"], params["b3"]

    B, K = x.shape
    H1, H2, N = w1.shape[1], w2.shape[1], w3.shape[1]

    # Lane-align the hidden dims only (exact for a ReLU MLP); K and N stay true-sized.
    H1_p = _round_up(H1, 128)
    H2_p = _round_up(H2, 128)

    w_dtype = jnp.bfloat16 if use_bf16 else jnp.float32
    pad2 = lambda a, r, c: jnp.pad(a, ((0, r - a.shape[0]), (0, c - a.shape[1])))

    w1_p = pad2(w1, K, H1_p).astype(w_dtype)
    w2_p = pad2(w2, H1_p, H2_p).astype(w_dtype)
    w3_p = pad2(w3, H2_p, N).astype(w_dtype)
    b1_p = pad2(b1, 1, H1_p).astype(jnp.float32)
    b2_p = pad2(b2, 1, H2_p).astype(jnp.float32)
    b3_p = b3.astype(jnp.float32)

    tile_b = _pick_tile_b(B, K, H1_p, H2_p, N, max_tile_b)
    grid = (pl.cdiv(B, tile_b),)   # ragged last tile handled by masked edge blocks

    def resident(a):
        # Grid-invariant block -> DMA'd once, VMEM-resident across the whole grid.
        if single_buffer_weights:
            try:
                return pl.BlockSpec(a.shape, lambda i: (0, 0),
                                    pipeline_mode=pl.Buffered(1))
            except TypeError:  # older BlockSpec signature without pipeline_mode
                pass
        return pl.BlockSpec(a.shape, lambda i: (0, 0))

    weight_bufs = 1 if single_buffer_weights else 2
    weight_bytes = sum(int(a.size) * a.dtype.itemsize
                       for a in (w1_p, b1_p, w2_p, b2_p, w3_p, b3_p))
    step_bytes = (2 * tile_b * K * 4 + 2 * tile_b * N * 4
                  + tile_b * (H1_p + H2_p) * 6 + weight_bufs * weight_bytes)
    vmem_limit = int(min(32 << 20, max(16 << 20, 2 * step_bytes)))

    flops = 2 * B * (K * H1 + H1 * H2 + H2 * N)
    bytes_accessed = int(x.size) * x.dtype.itemsize + B * N * 4 + weight_bytes

    return pl.pallas_call(
        _mlp_kernel,
        out_shape=jax.ShapeDtypeStruct((B, N), jnp.float32),
        grid=grid,
        in_specs=[
            pl.BlockSpec((tile_b, K), lambda i: (i, 0)),   # x: batch-tiled, true K, f32
            resident(w1_p), resident(b1_p),
            resident(w2_p), resident(b2_p),
            resident(w3_p), resident(b3_p),
        ],
        out_specs=pl.BlockSpec((tile_b, N), lambda i: (i, 0)),  # true N, true B
        compiler_params=pltpu.CompilerParams(
            dimension_semantics=("parallel",),   # shard batch across TCs (v7x)
            vmem_limit_bytes=vmem_limit,
        ),
        cost_estimate=pl.CostEstimate(
            flops=flops, transcendentals=0, bytes_accessed=bytes_accessed),
    )(x, w1_p, b1_p, w2_p, b2_p, w3_p, b3_p)


def mlp_forward(x, params, *, max_tile_b=2048, use_bf16=True):
    """Fused 3-layer MLP forward pass in a single batch-tiled Pallas TPU kernel.

    x: [B, input_size] float32.
    params: dict with w1 (in,h1), b1 (1,h1), w2 (h1,h2), b2 (1,h2), w3 (h2,out),
            b3 (1,out) -- weights pre-transposed to (in, out), f32.
    """
    try:
        return _forward_impl(x, params, max_tile_b=max_tile_b, use_bf16=use_bf16,
                             single_buffer_weights=True)
    except Exception:
        # pl.Buffered(1) unsupported on this JAX/libtpu -> plain double-buffered specs.
        return _forward_impl(x, params, max_tile_b=max_tile_b, use_bf16=use_bf16,
                             single_buffer_weights=False)


def init_params(key, input_size, hidden1, hidden2, output_size):
    """Deterministic init mimicking nn.Linear's uniform(-1/sqrt(fan_in), +), stored
    pre-transposed as (in, out) for the kernel."""
    ks = jax.random.split(key, 6)

    def linear(kw, kb, fan_in, fan_out):
        bound = 1.0 / jnp.sqrt(jnp.float32(fan_in))
        w = jax.random.uniform(kw, (fan_in, fan_out), jnp.float32, -bound, bound)
        b = jax.random.uniform(kb, (1, fan_out), jnp.float32, -bound, bound)
        return w, b

    w1, b1 = linear(ks[0], ks[1], input_size, hidden1)
    w2, b2 = linear(ks[2], ks[3], hidden1, hidden2)
    w3, b3 = linear(ks[4], ks[5], hidden2, output_size)
    return {"w1": w1, "b1": b1, "w2": w2, "b2": b2, "w3": w3, "b3": b3}


def reference_forward(x, p):
    h1 = jnp.maximum(x @ p["w1"] + p["b1"], 0.0)
    h2 = jnp.maximum(h1 @ p["w2"] + p["b2"], 0.0)
    return h2 @ p["w3"] + p["b3"]


if __name__ == "__main__":
    # Small shapes consistent with the module's forward: x is [batch, input_size].
    batch, input_size, hidden1, hidden2, output_size = 8, 32, 64, 64, 16

    key = jax.random.PRNGKey(0)
    kx, kp = jax.random.split(key)
    x = jax.random.normal(kx, (batch, input_size), jnp.float32)
    params = init_params(kp, input_size, hidden1, hidden2, output_size)

    # Default (bf16 MXU inputs, f32 accumulation) -> loosened tolerance vs f32 reference.
    out = jax.block_until_ready(mlp_forward(x, params))
    ref = reference_forward(x, params)
    assert out.shape == (batch, output_size)
    assert jnp.allclose(out, ref, atol=2e-2, rtol=2e-2), float(jnp.max(jnp.abs(out - ref)))

    # Precision-faithful f32 path (per review correctness note) must also run and match.
    out_f32 = jax.block_until_ready(mlp_forward(x, params, use_bf16=False))
    assert jnp.allclose(out_f32, ref, atol=5e-3, rtol=5e-3), \
        float(jnp.max(jnp.abs(out_f32 - ref)))

    # TODO(synk): gen_string(network_arch) is not provided; the exec-built net is assumed
    # to be the standard Linear/ReLU/Linear/ReLU/Linear Sequential used by the thesis
    # training script.
    print("KERNEL_OK")
</pallas_src>

<mosaic_0001>
module attributes {stable_mosaic.version = 11 : i64} {
  func.func @_mlp_kernel(%arg0: i32, %arg1: memref<8x32xf32, #tpu.memory_space<vmem>>, %arg2: memref<32x128xbf16, #tpu.memory_space<vmem>>, %arg3: memref<1x128xf32, #tpu.memory_space<vmem>>, %arg4: memref<128x128xbf16, #tpu.memory_space<vmem>>, %arg5: memref<1x128xf32, #tpu.memory_space<vmem>>, %arg6: memref<128x16xbf16, #tpu.memory_space<vmem>>, %arg7: memref<1x16xf32, #tpu.memory_space<vmem>>, %arg8: memref<8x16xf32, #tpu.memory_space<vmem>>) attributes {dimension_semantics = [#tpu.dimension_semantics<parallel>], iteration_bounds = array<i64: 1>, scalar_prefetch = 0 : i64, scratch_operands = 0 : i64, tpu.core_type = #tpu.core_type<tc>, window_params = [{transform_indices = @transform_0, window_bounds = array<i64: 8, 32>}, {pipeline_mode = #tpu.pipeline_mode<synchronous>, transform_indices = @transform_1, window_bounds = array<i64: 32, 128>}, {pipeline_mode = #tpu.pipeline_mode<synchronous>, transform_indices = @transform_2, window_bounds = array<i64: 1, 128>}, {pipeline_mode = #tpu.pipeline_mode<synchronous>, transform_indices = @transform_3, window_bounds = array<i64: 128, 128>}, {pipeline_mode = #tpu.pipeline_mode<synchronous>, transform_indices = @transform_4, window_bounds = array<i64: 1, 128>}, {pipeline_mode = #tpu.pipeline_mode<synchronous>, transform_indices = @transform_5, window_bounds = array<i64: 128, 16>}, {pipeline_mode = #tpu.pipeline_mode<synchronous>, transform_indices = @transform_6, window_bounds = array<i64: 1, 16>}, {transform_indices = @transform_7, window_bounds = array<i64: 8, 16>}]} {
    %c0 = arith.constant 0 : index
    %c0_0 = arith.constant 0 : index
    %0 = vector.load %arg1[%c0, %c0_0] : memref<8x32xf32, #tpu.memory_space<vmem>>, vector<8x32xf32>
    %1 = arith.truncf %0 : vector<8x32xf32> to vector<8x32xbf16>
    %c0_1 = arith.constant 0 : index
    %c0_2 = arith.constant 0 : index
    %2 = vector.load %arg2[%c0_1, %c0_2] : memref<32x128xbf16, #tpu.memory_space<vmem>>, vector<32x128xbf16>
    %cst = arith.constant dense<0.000000e+00> : vector<8x128xf32>
    %3 = tpu.matmul %1, %2, %cst {dimension_numbers = #tpu.dot_dimension_numbers<[1], [0], [0], [1], [0, 0, 1, 1], [], []>} : vector<8x32xbf16>, vector<32x128xbf16>, vector<8x128xf32> -> vector<8x128xf32>
    %c0_3 = arith.constant 0 : index
    %c0_4 = arith.constant 0 : index
    %4 = vector.load %arg3[%c0_3, %c0_4] : memref<1x128xf32, #tpu.memory_space<vmem>>, vector<1x128xf32>
    %5 = vector.broadcast %4 : vector<1x128xf32> to vector<8x128xf32>
    %6 = arith.addf %3, %5 : vector<8x128xf32>
    %cst_5 = arith.constant 0.000000e+00 : f32
    %7 = vector.broadcast %cst_5 : f32 to vector<8x128xf32>
    %8 = arith.maximumf %6, %7 : vector<8x128xf32>
    %9 = arith.truncf %8 : vector<8x128xf32> to vector<8x128xbf16>
    %c0_6 = arith.constant 0 : index
    %c0_7 = arith.constant 0 : index
    %10 = vector.load %arg4[%c0_6, %c0_7] : memref<128x128xbf16, #tpu.memory_space<vmem>>, vector<128x128xbf16>
    %cst_8 = arith.constant dense<0.000000e+00> : vector<8x128xf32>
    %11 = tpu.matmul %9, %10, %cst_8 {dimension_numbers = #tpu.dot_dimension_numbers<[1], [0], [0], [1], [0, 0, 1, 1], [], []>} : vector<8x128xbf16>, vector<128x128xbf16>, vector<8x128xf32> -> vector<8x128xf32>
    %c0_9 = arith.constant 0 : index
    %c0_10 = arith.constant 0 : index
    %12 = vector.load %arg5[%c0_9, %c0_10] : memref<1x128xf32, #tpu.memory_space<vmem>>, vector<1x128xf32>
    %13 = vector.broadcast %12 : vector<1x128xf32> to vector<8x128xf32>
    %14 = arith.addf %11, %13 : vector<8x128xf32>
    %cst_11 = arith.constant 0.000000e+00 : f32
    %15 = vector.broadcast %cst_11 : f32 to vector<8x128xf32>
    %16 = arith.maximumf %14, %15 : vector<8x128xf32>
    %17 = arith.truncf %16 : vector<8x128xf32> to vector<8x128xbf16>
    %c0_12 = arith.constant 0 : index
    %c0_13 = arith.constant 0 : index
    %18 = vector.load %arg6[%c0_12, %c0_13] : memref<128x16xbf16, #tpu.memory_space<vmem>>, vector<128x16xbf16>
    %cst_14 = arith.constant dense<0.000000e+00> : vector<8x16xf32>
    %19 = tpu.matmul %17, %18, %cst_14 {dimension_numbers = #tpu.dot_dimension_numbers<[1], [0], [0], [1], [0, 0, 1, 1], [], []>} : vector<8x128xbf16>, vector<128x16xbf16>, vector<8x16xf32> -> vector<8x16xf32>
    %c0_15 = arith.constant 0 : index
    %c0_16 = arith.constant 0 : index
    %20 = vector.load %arg7[%c0_15, %c0_16] : memref<1x16xf32, #tpu.memory_space<vmem>>, vector<1x16xf32>
    %21 = vector.broadcast %20 : vector<1x16xf32> to vector<8x16xf32>
    %22 = arith.addf %19, %21 : vector<8x16xf32>
    %c0_17 = arith.constant 0 : index
    %c0_18 = arith.constant 0 : index
    %23 = vector.load %arg8[%c0_17, %c0_18] : memref<8x16xf32, #tpu.memory_space<vmem>>, vector<8x16xf32>
    tpu.vector_store %arg8[%c0_17, %c0_18], %22 {strides = array<i32>} : memref<8x16xf32, #tpu.memory_space<vmem>>, vector<8x16xf32>,
    return
  }
  func.func @transform_0(%arg0: i32) -> (i32, i32) {
    %c0_i32 = arith.constant 0 : i32
    %c0_i32_0 = arith.constant 0 : i32
    return %arg0, %c0_i32 : i32, i32
  }
  func.func @transform_1(%arg0: i32) -> (i32, i32) {
    %c0_i32 = arith.constant 0 : i32
    %c0_i32_0 = arith.constant 0 : i32
    %c0_i32_1 = arith.constant 0 : i32
    return %c0_i32, %c0_i32_0 : i32, i32
  }
  func.func @transform_2(%arg0: i32) -> (i32, i32) {
    %c0_i32 = arith.constant 0 : i32
    %c0_i32_0 = arith.constant 0 : i32
    %c0_i32_1 = arith.constant 0 : i32
    return %c0_i32, %c0_i32_0 : i32, i32
  }
  func.func @transform_3(%arg0: i32) -> (i32, i32) {
    %c0_i32 = arith.constant 0 : i32
    %c0_i32_0 = arith.constant 0 : i32
    %c0_i32_1 = arith.constant 0 : i32
    return %c0_i32, %c0_i32_0 : i32, i32
  }
  func.func @transform_4(%arg0: i32) -> (i32, i32) {
    %c0_i32 = arith.constant 0 : i32
    %c0_i32_0 = arith.constant 0 : i32
    %c0_i32_1 = arith.constant 0 : i32
    return %c0_i32, %c0_i32_0 : i32, i32
  }
  func.func @transform_5(%arg0: i32) -> (i32, i32) {
    %c0_i32 = arith.constant 0 : i32
    %c0_i32_0 = arith.constant 0 : i32
    %c0_i32_1 = arith.constant 0 : i32
    return %c0_i32, %c0_i32_0 : i32, i32
  }
  func.func @transform_6(%arg0: i32) -> (i32, i32) {
    %c0_i32 = arith.constant 0 : i32
    %c0_i32_0 = arith.constant 0 : i32
    %c0_i32_1 = arith.constant 0 : i32
    return %c0_i32, %c0_i32_0 : i32, i32
  }
  func.func @transform_7(%arg0: i32) -> (i32, i32) {
    %c0_i32 = arith.constant 0 : i32
    %c0_i32_0 = arith.constant 0 : i32
    return %arg0, %c0_i32 : i32, i32
  }
}

module attributes {stable_mosaic.version = 11 : i64} {
  func.func @_mlp_kernel(%arg0: i32, %arg1: memref<8x32xf32, #tpu.memory_space<vmem>>, %arg2: memref<32x128xbf16, #tpu.memory_space<vmem>>, %arg3: memref<1x128xf32, #tpu.memory_space<vmem>>, %arg4: memref<128x128xbf16, #tpu.memory_space<vmem>>, %arg5: memref<1x128xf32, #tpu.memory_space<vmem>>, %arg6: memref<128x16xbf16, #tpu.memory_space<vmem>>, %arg7: memref<1x16xf32, #tpu.memory_space<vmem>>, %arg8: memref<8x16xf32, #tpu.memory_space<vmem>>) attributes {dimension_semantics = [#tpu.dimension_semantics<parallel>], iteration_bounds = array<i64: 1>, scalar_prefetch = 0 : i64, scratch_operands = 0 : i64, tpu.core_type = #tpu.core_type<tc>, window_params = [{transform_indices = @transform_0, window_bounds = array<i64: 8, 32>}, {pipeline_mode = #tpu.pipeline_mode<synchronous>, transform_indices = @transform_1, window_bounds = array<i64: 32, 128>}, {pipeline_mode = #tpu.pipeline_mode<synchronous>, transform_indices = @transform_2, window_bounds = array<i64: 1, 128>}, {pipeline_mode = #tpu.pipeline_mode<synchronous>, transform_indices = @transform_3, window_bounds = array<i64: 128, 128>}, {pipeline_mode = #tpu.pipeline_mode<synchronous>, transform_indices = @transform_4, window_bounds = array<i64: 1, 128>}, {pipeline_mode = #tpu.pipeline_mode<synchronous>, transform_indices = @transform_5, window_bounds = array<i64: 128, 16>}, {pipeline_mode = #tpu.pipeline_mode<synchronous>, transform_indices = @transform_6, window_bounds = array<i64: 1, 16>}, {transform_indices = @transform_7, window_bounds = array<i64: 8, 16>}]} {
    %c0 = arith.constant 0 : index
    %c0_0 = arith.constant 0 : index
    %0 = vector.load %arg1[%c0, %c0_0] : memref<8x32xf32, #tpu.memory_space<vmem>>, vector<8x32xf32>
    %1 = arith.truncf %0 : vector<8x32xf32> to vector<8x32xbf16>
    %c0_1 = arith.constant 0 : index
    %c0_2 = arith.constant 0 : index
    %2 = vector.load %arg2[%c0_1, %c0_2] : memref<32x128xbf16, #tpu.memory_space<vmem>>, vector<32x128xbf16>
    %cst = arith.constant dense<0.000000e+00> : vector<8x128xf32>
    %3 = tpu.matmul %1, %2, %cst {dimension_numbers = #tpu.dot_dimension_numbers<[1], [0], [0], [1], [0, 0, 1, 1], [], []>} : vector<8x32xbf16>, vector<32x128xbf16>, vector<8x128xf32> -> vector<8x128xf32>
    %c0_3 = arith.constant 0 : index
    %c0_4 = arith.constant 0 : index
    %4 = vector.load %arg3[%c0_3, %c0_4] : memref<1x128xf32, #tpu.memory_space<vmem>>, vector<1x128xf32>
    %5 = vector.broadcast %4 : vector<1x128xf32> to vector<8x128xf32>
    %6 = arith.addf %3, %5 : vector<8x128xf32>
    %cst_5 = arith.constant 0.000000e+00 : f32
    %7 = vector.broadcast %cst_5 : f32 to vector<8x128xf32>
    %8 = arith.maximumf %6, %7 : vector<8x128xf32>
    %9 = arith.truncf %8 : vector<8x128xf32> to vector<8x128xbf16>
    %c0_6 = arith.constant 0 : index
    %c0_7 = arith.constant 0 : index
    %10 = vector.load %arg4[%c0_6, %c0_7] : memref<128x128xbf16, #tpu.memory_space<vmem>>, vector<128x128xbf16>
    %cst_8 = arith.constant dense<0.000000e+00> : vector<8x128xf32>
    %11 = tpu.matmul %9, %10, %cst_8 {dimension_numbers = #tpu.dot_dimension_numbers<[1], [0], [0], [1], [0, 0, 1, 1], [], []>} : vector<8x128xbf16>, vector<128x128xbf16>, vector<8x128xf32> -> vector<8x128xf32>
    %c0_9 = arith.constant 0 : index
    %c0_10 = arith.constant 0 : index
    %12 = vector.load %arg5[%c0_9, %c0_10] : memref<1x128xf32, #tpu.memory_space<vmem>>, vector<1x128xf32>
    %13 = vector.broadcast %12 : vector<1x128xf32> to vector<8x128xf32>
    %14 = arith.addf %11, %13 : vector<8x128xf32>
    %cst_11 = arith.constant 0.000000e+00 : f32
    %15 = vector.broadcast %cst_11 : f32 to vector<8x128xf32>
    %16 = arith.maximumf %14, %15 : vector<8x128xf32>
    %17 = arith.truncf %16 : vector<8x128xf32> to vector<8x128xbf16>
    %c0_12 = arith.constant 0 : index
    %c0_13 = arith.constant 0 : index
    %18 = vector.load %arg6[%c0_12, %c0_13] : memref<128x16xbf16, #tpu.memory_space<vmem>>, vector<128x16xbf16>
    %cst_14 = arith.constant dense<0.000000e+00> : vector<8x16xf32>
    %19 = tpu.matmul %17, %18, %cst_14 {dimension_numbers = #tpu.dot_dimension_numbers<[1], [0], [0], [1], [0, 0, 1, 1], [], []>} : vector<8x128xbf16>, vector<128x16xbf16>, vector<8x16xf32> -> vector<8x16xf32>
    %c0_15 = arith.constant 0 : index
    %c0_16 = arith.constant 0 : index
    %20 = vector.load %arg7[%c0_15, %c0_16] : memref<1x16xf32, #tpu.memory_space<vmem>>, vector<1x16xf32>
    %21 = vector.broadcast %20 : vector<1x16xf32> to vector<8x16xf32>
    %22 = arith.addf %19, %21 : vector<8x16xf32>
    %c0_17 = arith.constant 0 : index
    %c0_18 = arith.constant 0 : index
    %23 = vector.load %arg8[%c0_17, %c0_18] : memref<8x16xf32, #tpu.memory_space<vmem>>, vector<8x16xf32>
    tpu.vector_store %arg8[%c0_17, %c0_18], %22 {strides = array<i32>} : memref<8x16xf32, #tpu.memory_space<vmem>>, vector<8x16xf32>,
    return
  }
  func.func @transform_0(%arg0: i32) -> (i32, i32) {
    %c0_i32 = arith.constant 0 : i32
    %c0_i32_0 = arith.constant 0 : i32
    return %arg0, %c0_i32 : i32, i32
  }
  func.func @transform_1(%arg0: i32) -> (i32, i32) {
    %c0_i32 = arith.constant 0 : i32
    %c0_i32_0 = arith.constant 0 : i32
    %c0_i32_1 = arith.constant 0 : i32
    return %c0_i32, %c0_i32_0 : i32, i32
  }
  func.func @transform_2(%arg0: i32) -> (i32, i32) {
    %c0_i32 = arith.constant 0 : i32
    %c0_i32_0 = arith.constant 0 : i32
    %c0_i32_1 = arith.constant 0 : i32
    return %c0_i32, %c0_i32_0 : i32, i32
  }
  func.func @transform_3(%arg0: i32) -> (i32, i32) {
    %c0_i32 = arith.constant 0 : i32
    %c0_i32_0 = arith.constant 0 : i32
    %c0_i32_1 = arith.constant 0 : i32
    return %c0_i32, %c0_i32_0 : i32, i32
  }
  func.func @transform_4(%arg0: i32) -> (i32, i32) {
    %c0_i32 = arith.constant 0 : i32
    %c0_i32_0 = arith.constant 0 : i32
    %c0_i32_1 = arith.constant 0 : i32
    return %c0_i32, %c0_i32_0 : i32, i32
  }
  func.func @transform_5(%arg0: i32) -> (i32, i32) {
    %c0_i32 = arith.constant 0 : i32
    %c0_i32_0 = arith.constant 0 : i32
    %c0_i32_1 = arith.constant 0 : i32
    return %c0_i32, %c0_i32_0 : i32, i32
  }
  func.func @transform_6(%arg0: i32) -> (i32, i32) {
    %c0_i32 = arith.constant 0 : i32
    %c0_i32_0 = arith.constant 0 : i32
    %c0_i32_1 = arith.constant 0 : i32
    return %c0_i32, %c0_i32_0 : i32, i32
  }
  func.func @transform_7(%arg0: i32) -> (i32, i32) {
    %c0_i32 = arith.constant 0 : i32
    %c0_i32_0 = arith.constant 0 : i32
    return %arg0, %c0_i32 : i32, i32
  }
}

</mosaic_0001>

<llo_original>
// kernel: tpu_custom_call.1
$region0: #{tpu_custom_call.1}
  #allocation0 [shape = 'u32[]', space=smem, size = 0x4, offset = 0x4, fixed_abs, tag = 'smem constant byte address 0x4 - core index']
  #allocation1 [shape = 'u32[72,128]{1,0:T(1,128)}', space=vmem, size = 0x9000, scoped, tag = 'internal scratch']
  %s0 = inlined_call_operand.vmem [shape: f32[8,32], index: 0, kind: input, shape index: {}]
  %s1 = inlined_call_operand.hbm [shape: bf16[32,128], index: 1, kind: input, shape index: {}]
  %s2 = inlined_call_operand.vmem [shape: f32[1,128], index: 2, kind: input, shape index: {}]
  %s3 = inlined_call_operand.vmem [shape: bf16[128,128], index: 3, kind: input, shape index: {}]
  %s4 = inlined_call_operand.vmem [shape: f32[1,128], index: 4, kind: input, shape index: {}]
  %s5 = inlined_call_operand.vmem [shape: bf16[128,16], index: 5, kind: input, shape index: {}]
  %s6 = inlined_call_operand.vmem [shape: f32[1,16], index: 6, kind: input, shape index: {}]
  %s7 = inlined_call_operand.hbm [shape: f32[8,16], index: 7, kind: output, shape index: {}]
  %s8 = sld [smem:[#allocation0]]
  $region42: #{tpu_custom_call.1} parent=0
    _
  %s10 = ssub.s32 1, %s8
  %s11 = scalar_select 0, %s10, %s8
  $region1: #{tpu_custom_call.1} parent=0
    #allocation2 [shape = 'u8[8192]{0}', space=vmem, size = 0x2000, scoped, tag = 'input window, operand 1, single buffered']
    #allocation3 [shape = 's32[1]{0}', space=sflag, size = 0x4, scoped, tag = 'scoped memory for tpu_custom_call.1']
    #allocation4 [shape = 's32[1]{0}', space=sflag, size = 0x4, scoped, tag = 'scoped memory for tpu_custom_call.1']
    #allocation5 [shape = 'u8[4096]{0}', space=vmem, size = 0x1000, scoped, tag = 'output window, operand 0, single buffered']
    %12 = vsyncpa [#allocation3], 0
    %13 = vsyncpa [#allocation4], 0
    // Predicated region
    $region2: #{tpu_custom_call.1} parent=1 // pred_check
      _
    $region3: #{tpu_custom_call.1} parent=1 // pred_check_branch
      %15 = sbr.rel (0) target = $region5
    $region4: #{tpu_custom_call.1} parent=1 // pred_region
      _
    $region5: #{tpu_custom_call.1} parent=1 // pred_fallthru
      _
    // Predicated region
    $region6: #{tpu_custom_call.1} parent=1 // pred_check
      _
    $region7: #{tpu_custom_call.1} parent=1 // pred_check_branch
      %17 = sbr.rel (0) target = $region9
    $region8: #{tpu_custom_call.1} parent=1 // pred_region
      %19 = vsyncadd [#allocation3], 0
      %s20 = sshll.u32 %s1, 4
      %s21 = int_to_ptr.hbm [resolvable:$true] %s20
      %s22 = sshll.u32 [#allocation2], 4
      %s23 = int_to_ptr.vmem [resolvable:$true] %s22
      %28 = dma.hbm_to_vmem [thread:$0]  %s21, 256, %s23, [#allocation3], 64, 64, 4
    $region9: #{tpu_custom_call.1} parent=1 // pred_fallthru
      _
    // Predicated region
    $region10: #{tpu_custom_call.1} parent=1 // pred_check
      _
    $region11: #{tpu_custom_call.1} parent=1 // pred_check_branch
      %30 = sbr.rel (0) target = $region13
    $region12: #{tpu_custom_call.1} parent=1 // pred_region
      _
    $region13: #{tpu_custom_call.1} parent=1 // pred_fallthru
      _
    // Predicated region
    $region14: #{tpu_custom_call.1} parent=1 // pred_check
      _
    $region15: #{tpu_custom_call.1} parent=1 // pred_check_branch
      %32 = sbr.rel (0) target = $region17
    $region16: #{tpu_custom_call.1} parent=1 // pred_region
      _
    $region17: #{tpu_custom_call.1} parent=1 // pred_fallthru
      _
    // Predicated region
    $region18: #{tpu_custom_call.1} parent=1 // pred_check
      _
    $region19: #{tpu_custom_call.1} parent=1 // pred_check_branch
      %34 = sbr.rel (0) target = $region21
    $region20: #{tpu_custom_call.1} parent=1 // pred_region
      _
    $region21: #{tpu_custom_call.1} parent=1 // pred_fallthru
      _
    // Predicated region
    $region22: #{tpu_custom_call.1} parent=1 // pred_check
      _
    $region23: #{tpu_custom_call.1} parent=1 // pred_check_branch
      %36 = sbr.rel (0) target = $region25
    $region24: #{tpu_custom_call.1} parent=1 // pred_region
      _
    $region25: #{tpu_custom_call.1} parent=1 // pred_fallthru
      _
    // Predicated region
    $region26: #{tpu_custom_call.1} parent=1 // pred_check
      _
    $region27: #{tpu_custom_call.1} parent=1 // pred_check_branch
      %38 = sbr.rel (0) target = $region29
    $region28: #{tpu_custom_call.1} parent=1 // pred_region
      _
    $region29: #{tpu_custom_call.1} parent=1 // pred_fallthru
      _
    // Predicated region
    $region30: #{tpu_custom_call.1} parent=1 // pred_check
      _
    $region31: #{tpu_custom_call.1} parent=1 // pred_check_branch
      %40 = sbr.rel (0) target = $region33
    $region32: #{tpu_custom_call.1} parent=1 // pred_region
      %42 = dma.done [#allocation3], 256
    $region33: #{tpu_custom_call.1} parent=1 // pred_fallthru
      _
    %v44 = vld [vmem:[%s0] sm:$0xff]
    %v45 = vpack.c.bf16 %v44, %v44
    %v46 = vld [vmem:[#allocation2] sm:$0xf]
    %v47 = vld [vmem:[#allocation2 + $0x4] sm:$0xf]
    %v48 = vld [vmem:[#allocation2 + $0x8] sm:$0xf]
    %v49 = vld [vmem:[#allocation2 + $0xc] sm:$0xf]
    %v50 = vld [vmem:[%s2] sm:$0x1]
    %v52 = vperm.slane %v50, 0
    %v58 = vunpack.c.l.b16 %v46
    %v59 = vunpack.c.l.b16 %v47
    %v60 = vunpack.c.l.b16 %v48
    %v61 = vunpack.c.l.b16 %v49
    %v62 = vpack.c.b16 %v59, %v58
    %v63 = vpack.c.b16 %v61, %v60
    %vm66 = vcmask 261120
    %v68 = vsel %vm66, %v45, 0
    %70 = vmatpush.bf16.msra.mxu0 0
    %71 = vmatpush.bf16.msra.mxu0 0
    %72 = vmatpush.bf16.msra.mxu0 0
    %73 = vmatpush.bf16.msra.mxu0 0
    %74 = vmatpush.bf16.msra.mxu0 0
    %75 = vmatpush.bf16.msra.mxu0 0
    %76 = vmatpush.bf16.msra.mxu0 %v63
    %77 = vmatpush.bf16.msra.mxu0 %v62
    %78 = vmatmul.bf16.gmra.mxu0 %v68
    %v79 = vpop.f32.mrf.mxu0
    %v80 = vadd.f32 %v52, %v79
    %v81 = vpop.f32.mrf.mxu0
    %82 = vdwg.mxu0
    %v83 = vmax.f32 %v80, 0.0
    %v84 = vpack.c.bf16 %v83, %v83
    %v85 = vld [vmem:[%s3] sm:$0xf]
    %v86 = vld [vmem:[%s3 + $0x4] sm:$0xf]
    %v87 = vld [vmem:[%s3 + $0x8] sm:$0xf]
    %v88 = vld [vmem:[%s3 + $0xc] sm:$0xf]
    %v89 = vld [vmem:[%s3 + $0x10] sm:$0xf]
    %v90 = vld [vmem:[%s3 + $0x14] sm:$0xf]
    %v91 = vld [vmem:[%s3 + $0x18] sm:$0xf]
    %v92 = vld [vmem:[%s3 + $0x1c] sm:$0xf]
    %v93 = vld [vmem:[%s3 + $0x20] sm:$0xf]
    %v94 = vld [vmem:[%s3 + $0x24] sm:$0xf]
    %v95 = vld [vmem:[%s3 + $0x28] sm:$0xf]
    %v96 = vld [vmem:[%s3 + $0x2c] sm:$0xf]
    %v97 = vld [vmem:[%s3 + $0x30] sm:$0xf]
    %v98 = vld [vmem:[%s3 + $0x34] sm:$0xf]
    %v99 = vld [vmem:[%s3 + $0x38] sm:$0xf]
    %v100 = vld [vmem:[%s3 + $0x3c] sm:$0xf]
    %v101 = vld [vmem:[%s4] sm:$0x1]
    %v103 = vperm.slane %v101, 0
    %v121 = vunpack.c.l.b16 %v85
    %v122 = vunpack.c.l.b16 %v86
    %v123 = vunpack.c.l.b16 %v87
    %v124 = vunpack.c.l.b16 %v88
    %v125 = vunpack.c.l.b16 %v89
    %v126 = vunpack.c.l.b16 %v90
    %v127 = vunpack.c.l.b16 %v91
    %v128 = vunpack.c.l.b16 %v92
    %v129 = vunpack.c.l.b16 %v93
    %v130 = vunpack.c.l.b16 %v94
    %v131 = vunpack.c.l.b16 %v95
    %v132 = vunpack.c.l.b16 %v96
    %v133 = vunpack.c.l.b16 %v97
    %v134 = vunpack.c.l.b16 %v98
    %v135 = vunpack.c.l.b16 %v99
    %v136 = vunpack.c.l.b16 %v100
    %v137 = vpack.c.b16 %v122, %v121
    %v138 = vpack.c.b16 %v124, %v123
    %v139 = vpack.c.b16 %v126, %v125
    %v140 = vpack.c.b16 %v128, %v127
    %v141 = vpack.c.b16 %v130, %v129
    %v142 = vpack.c.b16 %v132, %v131
    %v143 = vpack.c.b16 %v134, %v133
    %v144 = vpack.c.b16 %v136, %v135
    %153 = vmatpush.bf16.msra.mxu0 %v144
    %154 = vmatpush.bf16.msra.mxu0 %v143
    %155 = vmatpush.bf16.msra.mxu0 %v142
    %156 = vmatpush.bf16.msra.mxu0 %v141
    %157 = vmatpush.bf16.msra.mxu0 %v140
    %158 = vmatpush.bf16.msra.mxu0 %v139
    %159 = vmatpush.bf16.msra.mxu0 %v138
    %160 = vmatpush.bf16.msra.mxu0 %v137
    %161 = vmatmul.bf16.gmra.mxu0 %v84
    %v162 = vpop.f32.mrf.mxu0
    %v163 = vadd.f32 %v103, %v162
    %v164 = vpop.f32.mrf.mxu0
    %165 = vdwg.mxu0
    %v166 = vmax.f32 %v163, 0.0
    %v167 = vpack.c.bf16 %v166, %v166
    %v168 = vld [vmem:[%s5] sm:$0xf]
    %v169 = vld [vmem:[%s5 + $0x4] sm:$0xf]
    %v170 = vld [vmem:[%s5 + $0x8] sm:$0xf]
    %v171 = vld [vmem:[%s5 + $0xc] sm:$0xf]
    %v172 = vld [vmem:[%s5 + $0x10] sm:$0xf]
    %v173 = vld [vmem:[%s5 + $0x14] sm:$0xf]
    %v174 = vld [vmem:[%s5 + $0x18] sm:$0xf]
    %v175 = vld [vmem:[%s5 + $0x1c] sm:$0xf]
    %v176 = vld [vmem:[%s5 + $0x20] sm:$0xf]
    %v177 = vld [vmem:[%s5 + $0x24] sm:$0xf]
    %v178 = vld [vmem:[%s5 + $0x28] sm:$0xf]
    %v179 = vld [vmem:[%s5 + $0x2c] sm:$0xf]
    %v180 = vld [vmem:[%s5 + $0x30] sm:$0xf]
    %v181 = vld [vmem:[%s5 + $0x34] sm:$0xf]
    %v182 = vld [vmem:[%s5 + $0x38] sm:$0xf]
    %v183 = vld [vmem:[%s5 + $0x3c] sm:$0xf]
    %v184 = vld [vmem:[%s6] sm:$0x1]
    %v186 = vperm.slane %v184, 0
    %v204 = vunpack.c.l.b16 %v168
    %v205 = vunpack.c.l.b16 %v169
    %v206 = vunpack.c.l.b16 %v170
    %v207 = vunpack.c.l.b16 %v171
    %v208 = vunpack.c.l.b16 %v172
    %v209 = vunpack.c.l.b16 %v173
    %v210 = vunpack.c.l.b16 %v174
    %v211 = vunpack.c.l.b16 %v175
    %v212 = vunpack.c.l.b16 %v176
    %v213 = vunpack.c.l.b16 %v177
    %v214 = vunpack.c.l.b16 %v178
    %v215 = vunpack.c.l.b16 %v179
    %v216 = vunpack.c.l.b16 %v180
    %v217 = vunpack.c.l.b16 %v181
    %v218 = vunpack.c.l.b16 %v182
    %v219 = vunpack.c.l.b16 %v183
    %v220 = vpack.c.b16 %v205, %v204
    %v221 = vpack.c.b16 %v207, %v206
    %v222 = vpack.c.b16 %v209, %v208
    %v223 = vpack.c.b16 %v211, %v210
    %v224 = vpack.c.b16 %v213, %v212
    %v225 = vpack.c.b16 %v215, %v214
    %v226 = vpack.c.b16 %v217, %v216
    %v227 = vpack.c.b16 %v219, %v218
    %236 = vmatpush.bf16.msra.mxu0 %v227
    %237 = vmatpush.bf16.msra.mxu0 %v226
    %238 = vmatpush.bf16.msra.mxu0 %v225
    %239 = vmatpush.bf16.msra.mxu0 %v224
    %240 = vmatpush.bf16.msra.mxu0 %v223
    %241 = vmatpush.bf16.msra.mxu0 %v222
    %242 = vmatpush.bf16.msra.mxu0 %v221
    %243 = vmatpush.bf16.msra.mxu0 %v220
    %244 = vmatmul.bf16.gmra.mxu0 %v167
    %v245 = vpop.f32.mrf.mxu0
    %v246 = vadd.f32 %v186, %v245
    %v247 = vpop.f32.mrf.mxu0
    %248 = vdwg.mxu0
    %vm249 = vcmask 130048
    %250 = vst.msk [vmem:[#allocation5] sm:$0xff] %vm249, %v246
    // Predicated region
    $region34: #{tpu_custom_call.1} parent=1 // pred_check
      _
    $region35: #{tpu_custom_call.1} parent=1 // pred_check_branch
      %252 = sbr.rel (0) target = $region37
    $region36: #{tpu_custom_call.1} parent=1 // pred_region
      %254 = vsyncadd [#allocation4], 0
      %s256 = sshll.u32 [#allocation5], 4
      %s257 = int_to_ptr.vmem [resolvable:$true] %s256
      %s258 = sshll.u32 %s7, 4
      %s259 = int_to_ptr.hbm [resolvable:$true] %s258
      %261 = dma.vmem_to_hbm [thread:$0]  %s257, 128, %s259, [#allocation4]
    $region37: #{tpu_custom_call.1} parent=1 // pred_fallthru
      _
    // Predicated region
    $region38: #{tpu_custom_call.1} parent=1 // pred_check
      _
    $region39: #{tpu_custom_call.1} parent=1 // pred_check_branch
      %263 = sbr.rel (0) target = $region41
    $region40: #{tpu_custom_call.1} parent=1 // pred_region
      %265 = dma.done [#allocation4], 128
    $region41: #{tpu_custom_call.1} parent=1 // pred_fallthru
      _
    %266 = vsyncpa [#allocation3], 1
    %267 = vsyncpa [#allocation4], 1

// kernel: tpu_custom_call.1
$region0: #{tpu_custom_call.1}
  #allocation0 [shape = 'u32[]', space=smem, size = 0x4, offset = 0x4, fixed_abs, tag = 'smem constant byte address 0x4 - core index']
  #allocation1 [shape = 'u32[72,128]{1,0:T(1,128)}', space=vmem, size = 0x9000, scoped, tag = 'internal scratch']
  %s0 = inlined_call_operand.vmem [shape: f32[8,32], index: 0, kind: input, shape index: {}]
  %s1 = inlined_call_operand.hbm [shape: bf16[32,128], index: 1, kind: input, shape index: {}]
  %s2 = inlined_call_operand.vmem [shape: f32[1,128], index: 2, kind: input, shape index: {}]
  %s3 = inlined_call_operand.vmem [shape: bf16[128,128], index: 3, kind: input, shape index: {}]
  %s4 = inlined_call_operand.vmem [shape: f32[1,128], index: 4, kind: input, shape index: {}]
  %s5 = inlined_call_operand.vmem [shape: bf16[128,16], index: 5, kind: input, shape index: {}]
  %s6 = inlined_call_operand.vmem [shape: f32[1,16], index: 6, kind: input, shape index: {}]
  %s7 = inlined_call_operand.hbm [shape: f32[8,16], index: 7, kind: output, shape index: {}]
  %s8 = sld [smem:[#allocation0]]
  $region42: #{tpu_custom_call.1} parent=0
    _
  %s10 = ssub.s32 1, %s8
  %s11 = scalar_select 0, %s10, %s8
  $region1: #{tpu_custom_call.1} parent=0
    #allocation2 [shape = 'u8[8192]{0}', space=vmem, size = 0x2000, scoped, tag = 'input window, operand 1, single buffered']
    #allocation3 [shape = 's32[1]{0}', space=sflag, size = 0x4, scoped, tag = 'scoped memory for tpu_custom_call.1']
    #allocation4 [shape = 's32[1]{0}', space=sflag, size = 0x4, scoped, tag = 'scoped memory for tpu_custom_call.1']
    #allocation5 [shape = 'u8[4096]{0}', space=vmem, size = 0x1000, scoped, tag = 'output window, operand 0, single buffered']
    %12 = vsyncpa [#allocation3], 0
    %13 = vsyncpa [#allocation4], 0
    // Predicated region
    $region2: #{tpu_custom_call.1} parent=1 // pred_check
      _
    $region3: #{tpu_custom_call.1} parent=1 // pred_check_branch
      %15 = sbr.rel (0) target = $region5
    $region4: #{tpu_custom_call.1} parent=1 // pred_region
      _
    $region5: #{tpu_custom_call.1} parent=1 // pred_fallthru
      _
    // Predicated region
    $region6: #{tpu_custom_call.1} parent=1 // pred_check
      _
    $region7: #{tpu_custom_call.1} parent=1 // pred_check_branch
      %17 = sbr.rel (0) target = $region9
    $region8: #{tpu_custom_call.1} parent=1 // pred_region
      %19 = vsyncadd [#allocation3], 0
      %s20 = sshll.u32 %s1, 4
      %s21 = int_to_ptr.hbm [resolvable:$true] %s20
      %s22 = sshll.u32 [#allocation2], 4
      %s23 = int_to_ptr.vmem [resolvable:$true] %s22
      %28 = dma.hbm_to_vmem [thread:$0]  %s21, 256, %s23, [#allocation3], 64, 64, 4
    $region9: #{tpu_custom_call.1} parent=1 // pred_fallthru
      _
    // Predicated region
    $region10: #{tpu_custom_call.1} parent=1 // pred_check
      _
    $region11: #{tpu_custom_call.1} parent=1 // pred_check_branch
      %30 = sbr.rel (0) target = $region13
    $region12: #{tpu_custom_call.1} parent=1 // pred_region
      _
    $region13: #{tpu_custom_call.1} parent=1 // pred_fallthru
      _
    // Predicated region
    $region14: #{tpu_custom_call.1} parent=1 // pred_check
      _
    $region15: #{tpu_custom_call.1} parent=1 // pred_check_branch
      %32 = sbr.rel (0) target = $region17
    $region16: #{tpu_custom_call.1} parent=1 // pred_region
      _
    $region17: #{tpu_custom_call.1} parent=1 // pred_fallthru
      _
    // Predicated region
    $region18: #{tpu_custom_call.1} parent=1 // pred_check
      _
    $region19: #{tpu_custom_call.1} parent=1 // pred_check_branch
      %34 = sbr.rel (0) target = $region21
    $region20: #{tpu_custom_call.1} parent=1 // pred_region
      _
    $region21: #{tpu_custom_call.1} parent=1 // pred_fallthru
      _
    // Predicated region
    $region22: #{tpu_custom_call.1} parent=1 // pred_check
      _
    $region23: #{tpu_custom_call.1} parent=1 // pred_check_branch
      %36 = sbr.rel (0) target = $region25
    $region24: #{tpu_custom_call.1} parent=1 // pred_region
      _
    $region25: #{tpu_custom_call.1} parent=1 // pred_fallthru
      _
    // Predicated region
    $region26: #{tpu_custom_call.1} parent=1 // pred_check
      _
    $region27: #{tpu_custom_call.1} parent=1 // pred_check_branch
      %38 = sbr.rel (0) target = $region29
    $region28: #{tpu_custom_call.1} parent=1 // pred_region
      _
    $region29: #{tpu_custom_call.1} parent=1 // pred_fallthru
      _
    // Predicated region
    $region30: #{tpu_custom_call.1} parent=1 // pred_check
      _
    $region31: #{tpu_custom_call.1} parent=1 // pred_check_branch
      %40 = sbr.rel (0) target = $region33
    $region32: #{tpu_custom_call.1} parent=1 // pred_region
      %42 = dma.done [#allocation3], 256
    $region33: #{tpu_custom_call.1} parent=1 // pred_fallthru
      _
    %v44 = vld [vmem:[%s0] sm:$0xff]
    %v45 = vpack.c.bf16 %v44, %v44
    %v46 = vld [vmem:[#allocation2] sm:$0xf]
    %v47 = vld [vmem:[#allocation2 + $0x4] sm:$0xf]
    %v48 = vld [vmem:[#allocation2 + $0x8] sm:$0xf]
    %v49 = vld [vmem:[#allocation2 + $0xc] sm:$0xf]
    %v50 = vld [vmem:[%s2] sm:$0x1]
    %v52 = vperm.slane %v50, 0
    %v58 = vunpack.c.l.b16 %v46
    %v59 = vunpack.c.l.b16 %v47
    %v60 = vunpack.c.l.b16 %v48
    %v61 = vunpack.c.l.b16 %v49
    %v62 = vpack.c.b16 %v59, %v58
    %v63 = vpack.c.b16 %v61, %v60
    %vm66 = vcmask 261120
    %v68 = vsel %vm66, %v45, 0
    %70 = vmatpush.bf16.msra.mxu0 0
    %71 = vmatpush.bf16.msra.mxu0 0
    %72 = vmatpush.bf16.msra.mxu0 0
    %73 = vmatpush.bf16.msra.mxu0 0
    %74 = vmatpush.bf16.msra.mxu0 0
    %75 = vmatpush.bf16.msra.mxu0 0
    %76 = vmatpush.bf16.msra.mxu0 %v63
    %77 = vmatpush.bf16.msra.mxu0 %v62
    %78 = vmatmul.bf16.gmra.mxu0 %v68
    %v79 = vpop.f32.mrf.mxu0
    %v80 = vadd.f32 %v52, %v79
    %v81 = vpop.f32.mrf.mxu0
    %82 = vdwg.mxu0
    %v83 = vmax.f32 %v80, 0.0
    %v84 = vpack.c.bf16 %v83, %v83
    %v85 = vld [vmem:[%s3] sm:$0xf]
    %v86 = vld [vmem:[%s3 + $0x4] sm:$0xf]
    %v87 = vld [vmem:[%s3 + $0x8] sm:$0xf]
    %v88 = vld [vmem:[%s3 + $0xc] sm:$0xf]
    %v89 = vld [vmem:[%s3 + $0x10] sm:$0xf]
    %v90 = vld [vmem:[%s3 + $0x14] sm:$0xf]
    %v91 = vld [vmem:[%s3 + $0x18] sm:$0xf]
    %v92 = vld [vmem:[%s3 + $0x1c] sm:$0xf]
    %v93 = vld [vmem:[%s3 + $0x20] sm:$0xf]
    %v94 = vld [vmem:[%s3 + $0x24] sm:$0xf]
    %v95 = vld [vmem:[%s3 + $0x28] sm:$0xf]
    %v96 = vld [vmem:[%s3 + $0x2c] sm:$0xf]
    %v97 = vld [vmem:[%s3 + $0x30] sm:$0xf]
    %v98 = vld [vmem:[%s3 + $0x34] sm:$0xf]
    %v99 = vld [vmem:[%s3 + $0x38] sm:$0xf]
    %v100 = vld [vmem:[%s3 + $0x3c] sm:$0xf]
    %v101 = vld [vmem:[%s4] sm:$0x1]
    %v103 = vperm.slane %v101, 0
    %v121 = vunpack.c.l.b16 %v85
    %v122 = vunpack.c.l.b16 %v86
    %v123 = vunpack.c.l.b16 %v87
    %v124 = vunpack.c.l.b16 %v88
    %v125 = vunpack.c.l.b16 %v89
    %v126 = vunpack.c.l.b16 %v90
    %v127 = vunpack.c.l.b16 %v91
    %v128 = vunpack.c.l.b16 %v92
    %v129 = vunpack.c.l.b16 %v93
    %v130 = vunpack.c.l.b16 %v94
    %v131 = vunpack.c.l.b16 %v95
    %v132 = vunpack.c.l.b16 %v96
    %v133 = vunpack.c.l.b16 %v97
    %v134 = vunpack.c.l.b16 %v98
    %v135 = vunpack.c.l.b16 %v99
    %v136 = vunpack.c.l.b16 %v100
    %v137 = vpack.c.b16 %v122, %v121
    %v138 = vpack.c.b16 %v124, %v123
    %v139 = vpack.c.b16 %v126, %v125
    %v140 = vpack.c.b16 %v128, %v127
    %v141 = vpack.c.b16 %v130, %v129
    %v142 = vpack.c.b16 %v132, %v131
    %v143 = vpack.c.b16 %v134, %v133
    %v144 = vpack.c.b16 %v136, %v135
    %153 = vmatpush.bf16.msra.mxu0 %v144
    %154 = vmatpush.bf16.msra.mxu0 %v143
    %155 = vmatpush.bf16.msra.mxu0 %v142
    %156 = vmatpush.bf16.msra.mxu0 %v141
    %157 = vmatpush.bf16.msra.mxu0 %v140
    %158 = vmatpush.bf16.msra.mxu0 %v139
    %159 = vmatpush.bf16.msra.mxu0 %v138
    %160 = vmatpush.bf16.msra.mxu0 %v137
    %161 = vmatmul.bf16.gmra.mxu0 %v84
    %v162 = vpop.f32.mrf.mxu0
    %v163 = vadd.f32 %v103, %v162
    %v164 = vpop.f32.mrf.mxu0
    %165 = vdwg.mxu0
    %v166 = vmax.f32 %v163, 0.0
    %v167 = vpack.c.bf16 %v166, %v166
    %v168 = vld [vmem:[%s5] sm:$0xf]
    %v169 = vld [vmem:[%s5 + $0x4] sm:$0xf]
    %v170 = vld [vmem:[%s5 + $0x8] sm:$0xf]
    %v171 = vld [vmem:[%s5 + $0xc] sm:$0xf]
    %v172 = vld [vmem:[%s5 + $0x10] sm:$0xf]
    %v173 = vld [vmem:[%s5 + $0x14] sm:$0xf]
    %v174 = vld [vmem:[%s5 + $0x18] sm:$0xf]
    %v175 = vld [vmem:[%s5 + $0x1c] sm:$0xf]
    %v176 = vld [vmem:[%s5 + $0x20] sm:$0xf]
    %v177 = vld [vmem:[%s5 + $0x24] sm:$0xf]
    %v178 = vld [vmem:[%s5 + $0x28] sm:$0xf]
    %v179 = vld [vmem:[%s5 + $0x2c] sm:$0xf]
    %v180 = vld [vmem:[%s5 + $0x30] sm:$0xf]
    %v181 = vld [vmem:[%s5 + $0x34] sm:$0xf]
    %v182 = vld [vmem:[%s5 + $0x38] sm:$0xf]
    %v183 = vld [vmem:[%s5 + $0x3c] sm:$0xf]
    %v184 = vld [vmem:[%s6] sm:$0x1]
    %v186 = vperm.slane %v184, 0
    %v204 = vunpack.c.l.b16 %v168
    %v205 = vunpack.c.l.b16 %v169
    %v206 = vunpack.c.l.b16 %v170
    %v207 = vunpack.c.l.b16 %v171
    %v208 = vunpack.c.l.b16 %v172
    %v209 = vunpack.c.l.b16 %v173
    %v210 = vunpack.c.l.b16 %v174
    %v211 = vunpack.c.l.b16 %v175
    %v212 = vunpack.c.l.b16 %v176
    %v213 = vunpack.c.l.b16 %v177
    %v214 = vunpack.c.l.b16 %v178
    %v215 = vunpack.c.l.b16 %v179
    %v216 = vunpack.c.l.b16 %v180
    %v217 = vunpack.c.l.b16 %v181
    %v218 = vunpack.c.l.b16 %v182
    %v219 = vunpack.c.l.b16 %v183
    %v220 = vpack.c.b16 %v205, %v204
    %v221 = vpack.c.b16 %v207, %v206
    %v222 = vpack.c.b16 %v209, %v208
    %v223 = vpack.c.b16 %v211, %v210
    %v224 = vpack.c.b16 %v213, %v212
    %v225 = vpack.c.b16 %v215, %v214
    %v226 = vpack.c.b16 %v217, %v216
    %v227 = vpack.c.b16 %v219, %v218
    %236 = vmatpush.bf16.msra.mxu0 %v227
    %237 = vmatpush.bf16.msra.mxu0 %v226
    %238 = vmatpush.bf16.msra.mxu0 %v225
    %239 = vmatpush.bf16.msra.mxu0 %v224
    %240 = vmatpush.bf16.msra.mxu0 %v223
    %241 = vmatpush.bf16.msra.mxu0 %v222
    %242 = vmatpush.bf16.msra.mxu0 %v221
    %243 = vmatpush.bf16.msra.mxu0 %v220
    %244 = vmatmul.bf16.gmra.mxu0 %v167
    %v245 = vpop.f32.mrf.mxu0
    %v246 = vadd.f32 %v186, %v245
    %v247 = vpop.f32.mrf.mxu0
    %248 = vdwg.mxu0
    %vm249 = vcmask 130048
    %250 = vst.msk [vmem:[#allocation5] sm:$0xff] %vm249, %v246
    // Predicated region
    $region34: #{tpu_custom_call.1} parent=1 // pred_check
      _
    $region35: #{tpu_custom_call.1} parent=1 // pred_check_branch
      %252 = sbr.rel (0) target = $region37
    $region36: #{tpu_custom_call.1} parent=1 // pred_region
      %254 = vsyncadd [#allocation4], 0
      %s256 = sshll.u32 [#allocation5], 4
      %s257 = int_to_ptr.vmem [resolvable:$true] %s256
      %s258 = sshll.u32 %s7, 4
      %s259 = int_to_ptr.hbm [resolvable:$true] %s258
      %261 = dma.vmem_to_hbm [thread:$0]  %s257, 128, %s259, [#allocation4]
    $region37: #{tpu_custom_call.1} parent=1 // pred_fallthru
      _
    // Predicated region
    $region38: #{tpu_custom_call.1} parent=1 // pred_check
      _
    $region39: #{tpu_custom_call.1} parent=1 // pred_check_branch
      %263 = sbr.rel (0) target = $region41
    $region40: #{tpu_custom_call.1} parent=1 // pred_region
      %265 = dma.done [#allocation4], 128
    $region41: #{tpu_custom_call.1} parent=1 // pred_fallthru
      _
    %266 = vsyncpa [#allocation3], 1
    %267 = vsyncpa [#allocation4], 1

</llo_original>
